<compile_context>
chip_gen: v7x
topology: tpu7x:2x2x1
jax: 0.10.0
libtpu: 0.0.40
codegen_flags: <defaults>
</compile_context>

<pallas_src>
import functools

import jax
import jax.numpy as jnp
from jax import lax
from jax.experimental import pallas as pl
from jax.experimental.pallas import tpu as pltpu


def _log_sigmoid(x):
    # numerically stable logsigmoid: min(x, 0) - log1p(exp(-|x|))
    return jnp.minimum(x, 0.0) - jnp.log1p(jnp.exp(-jnp.abs(x)))


def _round_up(x, m):
    return ((x + m - 1) // m) * m


def _sublane(dtype):
    # dtype-dependent minimum sublane tile: 8 (f32), 16 (bf16), 32 (int8/fp8).
    return max(8, 32 // jnp.dtype(dtype).itemsize)


def _vmem_capacity_bytes():
    try:
        info = pltpu.get_tpu_info()
        cap = int(getattr(info, "vmem_capacity_bytes", 0))
        if cap > 0:
            return cap
    except Exception:
        pass
    return 64 * 1024 * 1024  # conservative fallback (v7x per-core VMEM)


# --------------------------------------------------------------------------
# Fast path: both arrays fit in VMEM -> single invocation, no grid.
# --------------------------------------------------------------------------
def _nce_small_kernel(anchor_ref, pos_ref, neg_ref, out_ref):
    a = anchor_ref[...]  # (1, D)
    dn = (((1,), (1,)), ((), ()))
    pos = lax.dot_general(a, pos_ref[...], dn, preferred_element_type=jnp.float32)
    neg = lax.dot_general(a, neg_ref[...], dn, preferred_element_type=jnp.float32)
    s = (jnp.sum(_log_sigmoid(pos), axis=-1, keepdims=True)
         + jnp.sum(_log_sigmoid(-neg), axis=-1, keepdims=True))
    out_ref[...] = -s


# --------------------------------------------------------------------------
# Streaming path: one array (pos or neg), tiled over rows, per-core partials.
# --------------------------------------------------------------------------
def _nce_stream_kernel(anchor_ref, rows_ref, out_ref, *,
                       n_rows, tile, k_per_core, flip):
    c = pl.program_id(0)   # core / partial-sum index ("parallel")
    t = pl.program_id(1)   # row-tile index within this core ("arbitrary")

    @pl.when(t == 0)
    def _init():
        out_ref[...] = jnp.zeros_like(out_ref)

    # MXU: (1, D) x (T, D)^T -> lane-dense (1, T) logits, f32 accumulate.
    logits = lax.dot_general(anchor_ref[...], rows_ref[...],
                             (((1,), (1,)), ((), ())),
                             preferred_element_type=jnp.float32)
    if flip:
        logits = -logits
    row = (c * k_per_core + t) * tile + lax.broadcasted_iota(
        jnp.int32, logits.shape, 1)
    contrib = jnp.where(row < n_rows, _log_sigmoid(logits), 0.0)
    out_ref[...] -= jnp.sum(contrib, axis=-1, keepdims=True)


def _stream_partial(anchor2d, rows, flip, *, capacity, vmem_limit,
                    max_tile_rows=None):
    n, D = rows.shape
    itemsize = jnp.dtype(rows.dtype).itemsize
    sub = _sublane(rows.dtype)

    # One streamed tile targets ~capacity/4 bytes so the double-buffered pair
    # stays around capacity/2 (well under the 3/4-capacity vmem limit).
    per_tile_bytes = max(capacity // 4, sub * D * itemsize)
    budget_rows = max(sub, (per_tile_bytes // (D * itemsize)) // sub * sub)
    tile = min(budget_rows, _round_up(n, sub))
    if max_tile_rows is not None:
        tile = min(tile, max(sub, (max_tile_rows // sub) * sub))

    k_total = pl.cdiv(n, tile)
    # Leading "parallel" axis: splits the tile range across the 2 TensorCores
    # on v7x; on single-TC v5e/v6e it just serializes (negligible overhead).
    n_cores = 2 if k_total >= 2 else 1
    k_per_core = pl.cdiv(k_total, n_cores)

    # Robustness: never request less VMEM than the pipeline actually needs.
    needed = 2 * tile * D * itemsize + anchor2d.nbytes + (1 << 20)
    vmem_limit = min(capacity, max(vmem_limit, needed))

    kernel = functools.partial(_nce_stream_kernel, n_rows=n, tile=tile,
                               k_per_core=k_per_core, flip=flip)
    cost = pl.CostEstimate(
        flops=2 * n * D,
        transcendentals=2 * n,  # exp + log1p per logit
        bytes_accessed=n * D * itemsize
        + D * jnp.dtype(anchor2d.dtype).itemsize + 4 * n_cores,
    )

    out = pl.pallas_call(
        kernel,
        out_shape=jax.ShapeDtypeStruct((n_cores, 1), jnp.float32),
        grid=(n_cores, k_per_core),
        in_specs=[
            # anchor: one (1, D) block, constant index -> stays VMEM-resident.
            pl.BlockSpec((1, D), lambda c, t: (0, 0)),
            # streamed rows; clamp so the (possibly) redundant last per-core
            # tile reuses a valid block (its rows are masked to 0 anyway).
            pl.BlockSpec(
                (tile, D),
                lambda c, t: (jnp.minimum(c * k_per_core + t, k_total - 1), 0)),
        ],
        # per-core resident (1, 1) accumulator row.
        out_specs=pl.BlockSpec((1, 1), lambda c, t: (c, 0)),
        compiler_params=pltpu.CompilerParams(
            dimension_semantics=("parallel", "arbitrary"),
            vmem_limit_bytes=int(vmem_limit),
        ),
        cost_estimate=cost,
    )(anchor2d, rows)
    return jnp.sum(out)  # (n_cores, 1) partials -> scalar


def nce_loss(anchor, positives, negatives, *, max_tile_rows=None):
    """anchor: (D,), positives: (P, D), negatives: (N, D) -> scalar f32 loss."""
    D = anchor.shape[-1]
    P, Dp = positives.shape
    N, Dn = negatives.shape
    assert Dp == D and Dn == D and P >= 1 and N >= 1
    anchor2d = anchor.reshape(1, D)

    capacity = _vmem_capacity_bytes()
    vmem_limit = min(capacity, max(3 * capacity // 4, 8 * 1024 * 1024))

    pos_bytes = P * D * jnp.dtype(positives.dtype).itemsize
    neg_bytes = N * D * jnp.dtype(negatives.dtype).itemsize
    small = (max_tile_rows is None
             and pos_bytes + neg_bytes + anchor2d.nbytes <= capacity // 8)

    if small:
        # Everything fits comfortably in VMEM: single no-grid invocation.
        out = pl.pallas_call(
            _nce_small_kernel,
            out_shape=jax.ShapeDtypeStruct((1, 1), jnp.float32),
            in_specs=[pl.BlockSpec(memory_space=pltpu.MemorySpace.VMEM)] * 3,
            out_specs=pl.BlockSpec(memory_space=pltpu.MemorySpace.VMEM),
            compiler_params=pltpu.CompilerParams(
                vmem_limit_bytes=int(vmem_limit)),
        )(anchor2d, positives, negatives)
        return out[0, 0]

    # Two back-to-back streaming calls; each double-buffers only its own
    # stream, so tiles are ~2x larger at the same VMEM footprint.
    return (_stream_partial(anchor2d, positives, False,
                            capacity=capacity, vmem_limit=vmem_limit,
                            max_tile_rows=max_tile_rows)
            + _stream_partial(anchor2d, negatives, True,
                              capacity=capacity, vmem_limit=vmem_limit,
                              max_tile_rows=max_tile_rows))


if __name__ == "__main__":
    key = jax.random.PRNGKey(0)
    k1, k2, k3, k4, k5, k6 = jax.random.split(key, 6)

    def reference(anchor, positives, negatives):
        pos = positives @ anchor
        neg = negatives @ anchor
        return -(jnp.sum(jax.nn.log_sigmoid(pos))
                 + jnp.sum(jax.nn.log_sigmoid(-neg)))

    # Case 1: the module's implied shapes (vec_size=32, n_pos=8, n_negs=16)
    # -> exercises the no-grid fast path.
    D, P, N = 32, 8, 16
    anchor = jax.random.normal(k1, (D,), dtype=jnp.float32)
    positives = jax.random.normal(k2, (P, D), dtype=jnp.float32)
    negatives = jax.random.normal(k3, (N, D), dtype=jnp.float32)
    loss = nce_loss(anchor, positives, negatives)
    jax.block_until_ready(loss)
    ref = reference(anchor, positives, negatives)
    assert abs(float(loss) - float(ref)) <= 1e-2 * max(1.0, abs(float(ref))), \
        (float(loss), float(ref))

    # Case 2: forced small tiles -> exercises the streaming path, the 2-way
    # per-core partial sums, ragged-row masking and the clamped index map.
    D2, P2, N2 = 128, 24, 40
    anchor2 = jax.random.normal(k4, (D2,), dtype=jnp.float32)
    positives2 = jax.random.normal(k5, (P2, D2), dtype=jnp.float32)
    negatives2 = jax.random.normal(k6, (N2, D2), dtype=jnp.float32)
    loss2 = nce_loss(anchor2, positives2, negatives2, max_tile_rows=16)
    jax.block_until_ready(loss2)
    ref2 = reference(anchor2, positives2, negatives2)
    assert abs(float(loss2) - float(ref2)) <= 1e-2 * max(1.0, abs(float(ref2))), \
        (float(loss2), float(ref2))

    print("KERNEL_OK")
</pallas_src>

<mosaic_0001>
module attributes {stable_mosaic.version = 11 : i64} {
  func.func @_nce_small_kernel(%arg0: memref<1x32xf32, #tpu.memory_space<vmem>>, %arg1: memref<8x32xf32, #tpu.memory_space<vmem>>, %arg2: memref<16x32xf32, #tpu.memory_space<vmem>>, %arg3: memref<1x1xf32, #tpu.memory_space<vmem>>) attributes {dimension_semantics = [], scalar_prefetch = 0 : i64, scratch_operands = 0 : i64, tpu.core_type = #tpu.core_type<tc>} {
    %c0 = arith.constant 0 : index
    %c0_0 = arith.constant 0 : index
    %0 = vector.load %arg0[%c0, %c0_0] : memref<1x32xf32, #tpu.memory_space<vmem>>, vector<1x32xf32>
    %c0_1 = arith.constant 0 : index
    %c0_2 = arith.constant 0 : index
    %1 = vector.load %arg1[%c0_1, %c0_2] : memref<8x32xf32, #tpu.memory_space<vmem>>, vector<8x32xf32>
    %cst = arith.constant dense<0.000000e+00> : vector<1x8xf32>
    %2 = tpu.matmul %0, %1, %cst {dimension_numbers = #tpu.dot_dimension_numbers<[1], [1], [0], [0], [0, 0, 1, 0], [], []>} : vector<1x32xf32>, vector<8x32xf32>, vector<1x8xf32> -> vector<1x8xf32>
    %c0_3 = arith.constant 0 : index
    %c0_4 = arith.constant 0 : index
    %3 = vector.load %arg2[%c0_3, %c0_4] : memref<16x32xf32, #tpu.memory_space<vmem>>, vector<16x32xf32>
    %cst_5 = arith.constant dense<0.000000e+00> : vector<1x16xf32>
    %4 = tpu.matmul %0, %3, %cst_5 {dimension_numbers = #tpu.dot_dimension_numbers<[1], [1], [0], [0], [0, 0, 1, 0], [], []>} : vector<1x32xf32>, vector<16x32xf32>, vector<1x16xf32> -> vector<1x16xf32>
    %cst_6 = arith.constant 0.000000e+00 : f32
    %5 = vector.broadcast %cst_6 : f32 to vector<1x8xf32>
    %6 = arith.minimumf %2, %5 : vector<1x8xf32>
    %7 = math.absf %2 : vector<1x8xf32>
    %cst_7 = arith.constant 0.000000e+00 : f32
    %8 = vector.broadcast %cst_7 : f32 to vector<1x8xf32>
    %9 = arith.subf %8, %7 : vector<1x8xf32>
    %10 = math.exp %9 : vector<1x8xf32>
    %11 = math.log1p %10 : vector<1x8xf32>
    %12 = arith.subf %6, %11 : vector<1x8xf32>
    %cst_8 = arith.constant dense<0.000000e+00> : vector<1xf32>
    %13 = vector.multi_reduction <add>, %12, %cst_8 [1] : vector<1x8xf32> to vector<1xf32>
    %14 = vector.shape_cast %13 : vector<1xf32> to vector<1x1xf32>
    %cst_9 = arith.constant 0.000000e+00 : f32
    %15 = vector.broadcast %cst_9 : f32 to vector<1x16xf32>
    %16 = arith.subf %15, %4 : vector<1x16xf32>
    %cst_10 = arith.constant 0.000000e+00 : f32
    %17 = vector.broadcast %cst_10 : f32 to vector<1x16xf32>
    %18 = arith.minimumf %16, %17 : vector<1x16xf32>
    %19 = math.absf %16 : vector<1x16xf32>
    %cst_11 = arith.constant 0.000000e+00 : f32
    %20 = vector.broadcast %cst_11 : f32 to vector<1x16xf32>
    %21 = arith.subf %20, %19 : vector<1x16xf32>
    %22 = math.exp %21 : vector<1x16xf32>
    %23 = math.log1p %22 : vector<1x16xf32>
    %24 = arith.subf %18, %23 : vector<1x16xf32>
    %cst_12 = arith.constant dense<0.000000e+00> : vector<1xf32>
    %25 = vector.multi_reduction <add>, %24, %cst_12 [1] : vector<1x16xf32> to vector<1xf32>
    %26 = vector.shape_cast %25 : vector<1xf32> to vector<1x1xf32>
    %27 = arith.addf %14, %26 : vector<1x1xf32>
    %cst_13 = arith.constant 0.000000e+00 : f32
    %28 = vector.broadcast %cst_13 : f32 to vector<1x1xf32>
    %29 = arith.subf %28, %27 : vector<1x1xf32>
    %c0_14 = arith.constant 0 : index
    %c0_15 = arith.constant 0 : index
    %30 = vector.load %arg3[%c0_14, %c0_15] : memref<1x1xf32, #tpu.memory_space<vmem>>, vector<1x1xf32>
    tpu.vector_store %arg3[%c0_14, %c0_15], %29 {strides = array<i32>} : memref<1x1xf32, #tpu.memory_space<vmem>>, vector<1x1xf32>,
    return
  }
}

</mosaic_0001>

<llo_original>
// kernel: tpu_custom_call.1
$region0: #{tpu_custom_call.1}
  #allocation0 [shape = 'u32[]', space=smem, size = 0x4, offset = 0x4, fixed_abs, tag = 'smem constant byte address 0x4 - core index']
  #allocation1 [shape = 'u32[144,128]{1,0:T(1,128)}', space=vmem, size = 0x12000, scoped, tag = 'internal scratch']
  %s0 = inlined_call_operand.hbm [shape: f32[1,32], index: 0, kind: input, shape index: {}]
  %s1 = inlined_call_operand.hbm [shape: f32[8,32], index: 1, kind: input, shape index: {}]
  %s2 = inlined_call_operand.hbm [shape: f32[16,32], index: 2, kind: input, shape index: {}]
  %s3 = inlined_call_operand.hbm [shape: f32[1,1], index: 3, kind: output, shape index: {}]
  %s4 = sld [smem:[#allocation0]]
  $region34: #{tpu_custom_call.1} parent=0
    _
  %s6 = ssub.s32 1, %s4
  %s7 = scalar_select 0, %s6, %s4
  $region1: #{tpu_custom_call.1} parent=0
    #allocation2 [shape = 'u8[512]{0}', space=vmem, size = 0x400, scoped, tag = 'input window, operand 0, single buffered']
    #allocation3 [shape = 's32[1]{0}', space=sflag, size = 0x4, scoped, tag = 'scoped memory for tpu_custom_call.1']
    #allocation4 [shape = 's32[1]{0}', space=sflag, size = 0x4, scoped, tag = 'scoped memory for tpu_custom_call.1']
    #allocation5 [shape = 'u8[4096]{0}', space=vmem, size = 0x1000, scoped, tag = 'input window, operand 1, single buffered']
    #allocation6 [shape = 's32[1]{0}', space=sflag, size = 0x4, scoped, tag = 'scoped memory for tpu_custom_call.1']
    #allocation7 [shape = 'u8[8192]{0}', space=vmem, size = 0x2000, scoped, tag = 'input window, operand 2, single buffered']
    #allocation8 [shape = 'u8[512]{0}', space=vmem, size = 0x400, scoped, tag = 'output window, operand 0, single buffered']
    %8 = vsyncpa [#allocation3], 0
    %9 = vsyncpa [#allocation6], 0
    %10 = vsyncpa [#allocation4], 0
    // Predicated region
    $region2: #{tpu_custom_call.1} parent=1 // pred_check
      _
    $region3: #{tpu_custom_call.1} parent=1 // pred_check_branch
      %12 = sbr.rel (0) target = $region5
    $region4: #{tpu_custom_call.1} parent=1 // pred_region
      %s14 = ssub.s32 16, 16
      %15 = vsyncadd [#allocation3], %s14
      %s17 = sshll.u32 [#allocation2], 4
      %s18 = int_to_ptr.vmem [resolvable:$true] %s17
      %20 = dma.hbm_to_vmem [thread:$0]  %s0, 16, %s18, [#allocation3]
    $region5: #{tpu_custom_call.1} parent=1 // pred_fallthru
      _
    // Predicated region
    $region6: #{tpu_custom_call.1} parent=1 // pred_check
      _
    $region7: #{tpu_custom_call.1} parent=1 // pred_check_branch
      %22 = sbr.rel (0) target = $region9
    $region8: #{tpu_custom_call.1} parent=1 // pred_region
      %s24 = ssub.s32 128, 128
      %25 = vsyncadd [#allocation6], %s24
      %s27 = sshll.u32 [#allocation5], 4
      %s28 = int_to_ptr.vmem [resolvable:$true] %s27
      %30 = dma.hbm_to_vmem [thread:$0]  %s1, 128, %s28, [#allocation6]
    $region9: #{tpu_custom_call.1} parent=1 // pred_fallthru
      _
    // Predicated region
    $region10: #{tpu_custom_call.1} parent=1 // pred_check
      _
    $region11: #{tpu_custom_call.1} parent=1 // pred_check_branch
      %32 = sbr.rel (0) target = $region13
    $region12: #{tpu_custom_call.1} parent=1 // pred_region
      %s34 = ssub.s32 256, 256
      %35 = vsyncadd [#allocation6], %s34
      %s36 = sshll.u32 [#allocation7], 4
      %s37 = int_to_ptr.vmem [resolvable:$true] %s36
      %42 = dma.hbm_to_vmem [thread:$0]  %s2, 256, %s37, [#allocation6], 128, 128, 8
    $region13: #{tpu_custom_call.1} parent=1 // pred_fallthru
      _
    // Predicated region
    $region14: #{tpu_custom_call.1} parent=1 // pred_check
      _
    $region15: #{tpu_custom_call.1} parent=1 // pred_check_branch
      %44 = sbr.rel (0) target = $region17
    $region16: #{tpu_custom_call.1} parent=1 // pred_region
      %45 = dma.done [#allocation3], 16
    $region17: #{tpu_custom_call.1} parent=1 // pred_fallthru
      _
    // Predicated region
    $region18: #{tpu_custom_call.1} parent=1 // pred_check
      _
    $region19: #{tpu_custom_call.1} parent=1 // pred_check_branch
      %47 = sbr.rel (0) target = $region21
    $region20: #{tpu_custom_call.1} parent=1 // pred_region
      %48 = dma.done [#allocation6], 128
    $region21: #{tpu_custom_call.1} parent=1 // pred_fallthru
      _
    // Predicated region
    $region22: #{tpu_custom_call.1} parent=1 // pred_check
      _
    $region23: #{tpu_custom_call.1} parent=1 // pred_check_branch
      %50 = sbr.rel (0) target = $region25
    $region24: #{tpu_custom_call.1} parent=1 // pred_region
      %51 = dma.done [#allocation6], 256
    $region25: #{tpu_custom_call.1} parent=1 // pred_fallthru
      _
    %v52 = vld [vmem:[#allocation2] sm:$0x1]
    %v53 = vld [vmem:[#allocation5] sm:$0xff]
    %vm54 = vcmask 261120
    %v56 = vsel %vm54, %v52, 0
    %v59 = vsel %vm54, %v53, 0
    %61 = vmatprep.subr.mxu0 0.0
    %62 = vmatpush1.xpose.msra.mxu0 %v59
    %63 = vmatprep.subr.mxu0 0.0
    %64 = vmatpush1.xpose.msra.mxu0 0.0
    %65 = vmatprep.subr.mxu0 0.0
    %66 = vmatpush1.xpose.msra.mxu0 0.0
    %67 = vmatprep.subr.mxu0 0.0
    %68 = vmatpush1.xpose.msra.mxu0 0.0
    %69 = vmatprep.subr.mxu0 0.0
    %70 = vmatpush1.xpose.msra.mxu0 0.0
    %71 = vmatprep.subr.mxu0 0.0
    %72 = vmatpush1.xpose.msra.mxu0 0.0
    %73 = vmatprep.subr.mxu0 0.0
    %74 = vmatpush1.xpose.msra.mxu0 0.0
    %75 = vmatprep.subr.mxu0 0.0
    %76 = vmatpush1.xpose.msra.mxu0 0.0
    %77 = vmatprep.subr.mxu0 0.0
    %78 = vmatpush1.xpose.msra.mxu0 0.0
    %79 = vmatprep.subr.mxu0 0.0
    %80 = vmatpush1.xpose.msra.mxu0 0.0
    %81 = vmatprep.subr.mxu0 0.0
    %82 = vmatpush1.xpose.msra.mxu0 0.0
    %83 = vmatprep.subr.mxu0 0.0
    %84 = vmatpush1.xpose.msra.mxu0 0.0
    %85 = vmatprep.subr.mxu0 0.0
    %86 = vmatpush1.xpose.msra.mxu0 0.0
    %87 = vmatprep.subr.mxu0 0.0
    %88 = vmatpush1.xpose.msra.mxu0 0.0
    %89 = vmatprep.subr.mxu0 0.0
    %90 = vmatpush1.xpose.msra.mxu0 0.0
    %91 = vmatprep.subr.mxu0 0.0
    %92 = vmatpush1.xpose.msra.mxu0 0.0
    %93 = vmatprep.subr.mxu0 0.0
    %94 = vmatpush1.xpose.msra.mxu0 0.0
    %95 = vmatprep.subr.mxu0 0.0
    %96 = vmatpush1.xpose.msra.mxu0 0.0
    %97 = vmatprep.subr.mxu0 0.0
    %98 = vmatpush1.xpose.msra.mxu0 0.0
    %99 = vmatprep.subr.mxu0 0.0
    %100 = vmatpush1.xpose.msra.mxu0 0.0
    %101 = vmatprep.subr.mxu0 0.0
    %102 = vmatpush1.xpose.msra.mxu0 0.0
    %103 = vmatprep.subr.mxu0 0.0
    %104 = vmatpush1.xpose.msra.mxu0 0.0
    %105 = vmatprep.subr.mxu0 0.0
    %106 = vmatpush1.xpose.msra.mxu0 0.0
    %107 = vmatprep.subr.mxu0 0.0
    %108 = vmatpush1.xpose.msra.mxu0 0.0
    %109 = vmatprep.subr.mxu0 0.0
    %110 = vmatpush1.xpose.msra.mxu0 0.0
    %111 = vmatprep.subr.mxu0 0.0
    %112 = vmatpush1.xpose.msra.mxu0 0.0
    %113 = vmatprep.subr.mxu0 0.0
    %114 = vmatpush1.xpose.msra.mxu0 0.0
    %115 = vmatprep.subr.mxu0 0.0
    %116 = vmatpush1.xpose.msra.mxu0 0.0
    %117 = vmatprep.subr.mxu0 0.0
    %118 = vmatpush1.xpose.msra.mxu0 0.0
    %119 = vmatprep.subr.mxu0 0.0
    %120 = vmatpush1.xpose.msra.mxu0 0.0
    %121 = vmatprep.subr.mxu0 0.0
    %122 = vmatpush1.xpose.msra.mxu0 0.0
    %123 = vmatprep.subr.mxu0 0.0
    %124 = vmatpush1.xpose.msra.mxu0 0.0
    %125 = vmatprep.mubr.f32.mxu0 0.0
    %126 = vmatmul.mubr.f32.gmra.mrb[0].mxu0 %v56
    %v127 = vpop.f32.mrb[0].mxu0
    %v128 = vadd.f32 0.0, %v127
    %v129 = vpop.f32.mrb[0].mxu0
    %130 = vdwg.mxu0
    %v131 = vld [vmem:[#allocation7] sm:$0xff]
    %v132 = vld [vmem:[#allocation7 + $0x8] sm:$0xff]
    %v134 = vsel %vm54, %v131, 0
    %v137 = vsel %vm54, %v132, 0
    %139 = vmatprep.subr.mxu0 0.0
    %140 = vmatpush1.xpose.msra.mxu0 %v134
    %141 = vmatprep.subr.mxu0 0.0
    %142 = vmatpush1.xpose.msra.mxu0 %v137
    %143 = vmatprep.subr.mxu0 0.0
    %144 = vmatpush1.xpose.msra.mxu0 0.0
    %145 = vmatprep.subr.mxu0 0.0
    %146 = vmatpush1.xpose.msra.mxu0 0.0
    %147 = vmatprep.subr.mxu0 0.0
    %148 = vmatpush1.xpose.msra.mxu0 0.0
    %149 = vmatprep.subr.mxu0 0.0
    %150 = vmatpush1.xpose.msra.mxu0 0.0
    %151 = vmatprep.subr.mxu0 0.0
    %152 = vmatpush1.xpose.msra.mxu0 0.0
    %153 = vmatprep.subr.mxu0 0.0
    %154 = vmatpush1.xpose.msra.mxu0 0.0
    %155 = vmatprep.subr.mxu0 0.0
    %156 = vmatpush1.xpose.msra.mxu0 0.0
    %157 = vmatprep.subr.mxu0 0.0
    %158 = vmatpush1.xpose.msra.mxu0 0.0
    %159 = vmatprep.subr.mxu0 0.0
    %160 = vmatpush1.xpose.msra.mxu0 0.0
    %161 = vmatprep.subr.mxu0 0.0
    %162 = vmatpush1.xpose.msra.mxu0 0.0
    %163 = vmatprep.subr.mxu0 0.0
    %164 = vmatpush1.xpose.msra.mxu0 0.0
    %165 = vmatprep.subr.mxu0 0.0
    %166 = vmatpush1.xpose.msra.mxu0 0.0
    %167 = vmatprep.subr.mxu0 0.0
    %168 = vmatpush1.xpose.msra.mxu0 0.0
    %169 = vmatprep.subr.mxu0 0.0
    %170 = vmatpush1.xpose.msra.mxu0 0.0
    %171 = vmatprep.subr.mxu0 0.0
    %172 = vmatpush1.xpose.msra.mxu0 0.0
    %173 = vmatprep.subr.mxu0 0.0
    %174 = vmatpush1.xpose.msra.mxu0 0.0
    %175 = vmatprep.subr.mxu0 0.0
    %176 = vmatpush1.xpose.msra.mxu0 0.0
    %177 = vmatprep.subr.mxu0 0.0
    %178 = vmatpush1.xpose.msra.mxu0 0.0
    %179 = vmatprep.subr.mxu0 0.0
    %180 = vmatpush1.xpose.msra.mxu0 0.0
    %181 = vmatprep.subr.mxu0 0.0
    %182 = vmatpush1.xpose.msra.mxu0 0.0
    %183 = vmatprep.subr.mxu0 0.0
    %184 = vmatpush1.xpose.msra.mxu0 0.0
    %185 = vmatprep.subr.mxu0 0.0
    %186 = vmatpush1.xpose.msra.mxu0 0.0
    %187 = vmatprep.subr.mxu0 0.0
    %188 = vmatpush1.xpose.msra.mxu0 0.0
    %189 = vmatprep.subr.mxu0 0.0
    %190 = vmatpush1.xpose.msra.mxu0 0.0
    %191 = vmatprep.subr.mxu0 0.0
    %192 = vmatpush1.xpose.msra.mxu0 0.0
    %193 = vmatprep.subr.mxu0 0.0
    %194 = vmatpush1.xpose.msra.mxu0 0.0
    %195 = vmatprep.subr.mxu0 0.0
    %196 = vmatpush1.xpose.msra.mxu0 0.0
    %197 = vmatprep.subr.mxu0 0.0
    %198 = vmatpush1.xpose.msra.mxu0 0.0
    %199 = vmatprep.subr.mxu0 0.0
    %200 = vmatpush1.xpose.msra.mxu0 0.0
    %201 = vmatprep.subr.mxu0 0.0
    %202 = vmatpush1.xpose.msra.mxu0 0.0
    %203 = vmatprep.mubr.f32.mxu0 0.0
    %204 = vmatmul.mubr.f32.gmra.mrb[0].mxu0 %v56
    %v205 = vpop.f32.mrb[0].mxu0
    %v206 = vadd.f32 0.0, %v205
    %v207 = vpop.f32.mrb[0].mxu0
    %208 = vdwg.mxu0
    %v209 = vmin.f32 %v128, 0.0
    %v210 = vand.u32 2147483647, %v128
    %v211 = vsub.f32 0.0, %v210
    %v212 = vmul.f32 %v211, 1.442695
    %v213 = vpow.pop %v212
    %v214 = vadd.f32 %v213, 1.0
    %v215 = vlog2.pop %v214
    %v216 = vmul.f32 %v215, 0.6931472
    %v217 = vmul.f32 -0.5, %v213
    %v218 = vadd.f32 %v217, 1.0
    %v219 = vmul.f32 %v218, %v213
    %v220 = vand.u32 2147483647, %v213
    %vm221 = vcmp.lt.f32.partialorder %v220, 0.0004427343
    %v222 = vsel %vm221, %v219, %v216
    %v223 = vsub.f32 %v209, %v222
    %vm224 = vcmask 57344
    %v225 = vsel %vm224, %v223, 0.0
    %226 = vadd.xlane.f32.xlu0 %v225
    %v227 = vpop.xlane.xlu0 %226
    %v228 = vsub.f32 0.0, %v206
    %v229 = vmin.f32 %v228, 0.0
    %v230 = vand.u32 2147483647, %v228
    %v231 = vsub.f32 0.0, %v230
    %v232 = vmul.f32 %v231, 1.442695
    %v233 = vpow.pop %v232
    %v234 = vadd.f32 %v233, 1.0
    %v235 = vlog2.pop %v234
    %v236 = vmul.f32 %v235, 0.6931472
    %v237 = vmul.f32 -0.5, %v233
    %v238 = vadd.f32 %v237, 1.0
    %v239 = vmul.f32 %v238, %v233
    %v240 = vand.u32 2147483647, %v233
    %vm241 = vcmp.lt.f32.partialorder %v240, 0.0004427343
    %v242 = vsel %vm241, %v239, %v236
    %v243 = vsub.f32 %v229, %v242
    %vm244 = vcmask 122880
    %v245 = vsel %vm244, %v243, 0.0
    %246 = vadd.xlane.f32.xlu0 %v245
    %v247 = vpop.xlane.xlu0 %246
    %v248 = vadd.f32 %v227, %v247
    %v249 = vsub.f32 0.0, %v248
    %vm250 = vcmask 0
    %251 = vst.msk [vmem:[#allocation8] sm:$0x1] %vm250, %v249
    // Predicated region
    $region26: #{tpu_custom_call.1} parent=1 // pred_check
      _
    $region27: #{tpu_custom_call.1} parent=1 // pred_check_branch
      %253 = sbr.rel (0) target = $region29
    $region28: #{tpu_custom_call.1} parent=1 // pred_region
      %s255 = ssub.s32 16, 16
      %256 = vsyncadd [#allocation4], %s255
      %s258 = sshll.u32 [#allocation8], 4
      %s259 = int_to_ptr.vmem [resolvable:$true] %s258
      %261 = dma.vmem_to_hbm [thread:$0]  %s259, 16, %s3, [#allocation4]
    $region29: #{tpu_custom_call.1} parent=1 // pred_fallthru
      _
    // Predicated region
    $region30: #{tpu_custom_call.1} parent=1 // pred_check
      _
    $region31: #{tpu_custom_call.1} parent=1 // pred_check_branch
      %263 = sbr.rel (0) target = $region33
    $region32: #{tpu_custom_call.1} parent=1 // pred_region
      %264 = dma.done [#allocation4], 16
    $region33: #{tpu_custom_call.1} parent=1 // pred_fallthru
      _
    %265 = vsyncpa [#allocation3], 1
    %266 = vsyncpa [#allocation6], 1
    %267 = vsyncpa [#allocation4], 1

</llo_original>
